<compile_context>
chip_gen: v5e
topology: v5e:2x2
jax: 0.10.0
libtpu: 0.0.40
codegen_flags: <defaults>
</compile_context>

<pallas_src>
import numpy as np
import jax
import jax.numpy as jnp
from jax.experimental import pallas as pl
from jax.experimental.pallas import tpu as pltpu


# ----------------------------- mask construction (plain numpy, module glue) --
def _get_input_degrees(in_features):
    """Degrees an input to MADE should have: 1..in_features."""
    return np.arange(1, in_features + 1, dtype=np.int64)


def masked_linear_mask_and_degrees(in_degrees, out_features,
                                   autoregressive_features,
                                   random_mask=False, is_output=False):
    """Replicates MaskedLinear._get_mask_and_degrees (non-random, hidden)."""
    in_degrees = np.asarray(in_degrees, dtype=np.int64)
    if is_output:
        out_degrees = np.repeat(_get_input_degrees(autoregressive_features),
                                out_features // autoregressive_features)
        mask = (out_degrees[..., None] > in_degrees).astype(np.float32)
    else:
        if random_mask:
            # TODO(synk): random_mask=True (random degree sampling) not needed here.
            raise NotImplementedError
        max_ = max(1, autoregressive_features - 1)
        min_ = min(1, autoregressive_features - 1)
        out_degrees = np.arange(out_features, dtype=np.int64) % max_ + min_
        mask = (out_degrees[..., None] >= in_degrees).astype(np.float32)
    return mask, out_degrees


# ----------------------------- hardware-aware helpers --------------------------
def _round_up(x, m):
    return ((x + m - 1) // m) * m


def _tpu_vmem_capacity_bytes():
    try:
        cap = int(pltpu.get_tpu_info().vmem_capacity_bytes)
        if cap > 0:
            return cap
    except Exception:
        pass
    return 64 << 20  # conservative fallback (v7x per-TC VMEM)


def _feature_align():
    # v6e / v7x MXUs are 256x256 -> pad feature axes to 256; v5e and older are
    # 128-wide -> 128 is enough (and avoids doubling the K/N padding work).
    try:
        kind = jax.devices()[0].device_kind.lower()
    except Exception:
        return 128
    return 256 if ("v6" in kind or "v7" in kind) else 128


def _vmem_limit(vmem_bytes, vmem_cap):
    return int(max(16 << 20,
                   min(vmem_cap - (4 << 20),
                       max(32 << 20, vmem_bytes + (2 << 20)))))


def _choose_tile_b(B):
    b8 = _round_up(max(B, 1), 8)
    if b8 <= 256:
        return b8  # single grid step: whole batch in one MXU pass, no pipeline overhead
    # Large batch: 128..256-row tiles, aiming for >= ~4 grid steps so pipelining
    # reaches steady state and v7x's 2 TCs each get several iterations.
    return min(256, max(128, _round_up(pl.cdiv(b8, 4), 8)))


def _pick_feature_tile(Fp):
    for c in (1024, 512, 256, 128):
        if c <= Fp and Fp % c == 0:
            return c
    return Fp


# ----------------------------- Pallas kernels ---------------------------------
def _make_resident_kernel(matmul_dtype):
    # Whole (pre-masked, pre-transposed, padded) weight resident in VMEM.
    def kernel(x_ref, wt_ref, b_ref, o_ref):
        x = x_ref[...]
        if matmul_dtype is not None:
            x = x.astype(matmul_dtype)
        y = jnp.dot(x, wt_ref[...], preferred_element_type=jnp.float32)
        y = y + b_ref[...].astype(jnp.float32)
        o_ref[...] = jnp.maximum(y, 0.0).astype(o_ref.dtype)
    return kernel


def _make_tiled_kernel(matmul_dtype):
    # Large-F path: (batch, N, K) grid, f32 accumulator, K innermost/"arbitrary".
    def kernel(x_ref, wt_ref, b_ref, o_ref, acc_ref):
        k = pl.program_id(2)

        @pl.when(k == 0)
        def _():
            acc_ref[...] = jnp.zeros_like(acc_ref)

        x = x_ref[...]
        if matmul_dtype is not None:
            x = x.astype(matmul_dtype)
        acc_ref[...] += jnp.dot(x, wt_ref[...],
                                preferred_element_type=jnp.float32)

        @pl.when(k == pl.num_programs(2) - 1)
        def _():
            y = acc_ref[...] + b_ref[...].astype(jnp.float32)
            o_ref[...] = jnp.maximum(y, 0.0).astype(o_ref.dtype)
    return kernel


# ----------------------------- module factory ----------------------------------
def make_masked_feedforward_block(weight, mask, bias, *, matmul_dtype=None,
                                  tile_b=None):
    """Pre-folds mask into the weight, transposes and pads it ONCE (module-init
    time); returns f(x) = relu(x @ (weight*mask).T + bias) as a Pallas kernel."""
    weight = jnp.asarray(weight)
    mask = jnp.asarray(mask, dtype=weight.dtype)
    bias = jnp.asarray(bias)
    F_out, F_in = weight.shape
    assert F_out == F_in, "MaskedFeedforwardBlock uses out_features == in_features"
    F = F_in
    param_dtype = weight.dtype
    w_dtype = param_dtype if matmul_dtype is None else jnp.dtype(matmul_dtype)

    align = _feature_align()
    Fp = _round_up(F, align)

    # Fold the mask, transpose and pad ONCE (not per call).
    wt = (weight * mask).T.astype(w_dtype)                      # (F_in, F_out)
    if Fp != F:
        wt_p = jnp.zeros((Fp, Fp), w_dtype).at[:F, :F].set(wt)
        b_p = jnp.zeros((1, Fp), param_dtype).at[0, :F].set(bias.astype(param_dtype))
    else:
        wt_p = wt
        b_p = bias.astype(param_dtype).reshape(1, Fp)

    w_itemsize = jnp.dtype(w_dtype).itemsize
    b_itemsize = jnp.dtype(param_dtype).itemsize
    w_bytes = Fp * Fp * w_itemsize

    vmem_cap = _tpu_vmem_capacity_bytes()
    # Resident-weight path only while the (conservatively double-buffered)
    # weight leaves room for x/out tiles; otherwise stream weight tiles (N/K grid).
    use_resident = 2 * w_bytes <= vmem_cap // 2
    # Constant-index-map weight/bias never need a second buffer; single-buffer
    # them when the weight is big enough to matter.
    single_buffer_w = use_resident and w_bytes >= (4 << 20)
    resident_spec_kwargs = (dict(pipeline_mode=pl.Buffered(1))
                            if single_buffer_w else {})

    def apply(x):
        B, Fx = x.shape
        assert Fx == F
        dtype = x.dtype
        itemsize = jnp.dtype(dtype).itemsize

        # No batch padding (ragged last block); pad features only if needed.
        x_in = x if Fp == F else jnp.zeros((B, Fp), dtype).at[:, :F].set(x)

        tb = _choose_tile_b(B) if tile_b is None else tile_b
        tb = max(8, _round_up(min(tb, _round_up(B, 8)), 8))
        grid_b = pl.cdiv(B, tb)

        cost = pl.CostEstimate(
            flops=2 * B * Fp * Fp,
            transcendentals=0,
            bytes_accessed=(2 * B * Fp * itemsize + Fp * Fp * w_itemsize
                            + Fp * b_itemsize))

        if use_resident:
            n_w_buf = 1 if single_buffer_w else 2
            vmem_bytes = (n_w_buf * w_bytes
                          + 2 * tb * Fp * 2 * itemsize       # x + out, double-buffered
                          + 2 * Fp * b_itemsize)
            out = pl.pallas_call(
                _make_resident_kernel(matmul_dtype),
                out_shape=jax.ShapeDtypeStruct((B, Fp), dtype),
                grid_spec=pltpu.PrefetchScalarGridSpec(
                    num_scalar_prefetch=0,
                    grid=(grid_b,),
                    in_specs=[
                        pl.BlockSpec((tb, Fp), lambda i: (i, 0)),      # x tile (pipelined)
                        pl.BlockSpec((Fp, Fp), lambda i: (0, 0),       # masked W^T (resident)
                                     **resident_spec_kwargs),
                        pl.BlockSpec((1, Fp), lambda i: (0, 0),        # bias (resident)
                                     **resident_spec_kwargs),
                    ],
                    out_specs=pl.BlockSpec((tb, Fp), lambda i: (i, 0)),
                ),
                compiler_params=pltpu.CompilerParams(
                    dimension_semantics=("parallel",),
                    vmem_limit_bytes=_vmem_limit(vmem_bytes, vmem_cap)),
                cost_estimate=cost,
            )(x_in, wt_p, b_p)
        else:
            tn = tk = _pick_feature_tile(Fp)
            vmem_bytes = (2 * (tb * tk * itemsize + tk * tn * w_itemsize
                               + tb * tn * itemsize + tn * b_itemsize)
                          + tb * tn * 4)
            out = pl.pallas_call(
                _make_tiled_kernel(matmul_dtype),
                out_shape=jax.ShapeDtypeStruct((B, Fp), dtype),
                grid_spec=pltpu.PrefetchScalarGridSpec(
                    num_scalar_prefetch=0,
                    grid=(grid_b, Fp // tn, Fp // tk),
                    in_specs=[
                        pl.BlockSpec((tb, tk), lambda i, j, k: (i, k)),
                        pl.BlockSpec((tk, tn), lambda i, j, k: (k, j)),
                        pl.BlockSpec((1, tn), lambda i, j, k: (0, j)),
                    ],
                    out_specs=pl.BlockSpec((tb, tn), lambda i, j, k: (i, j)),
                    scratch_shapes=[pltpu.VMEM((tb, tn), jnp.float32)],
                ),
                compiler_params=pltpu.CompilerParams(
                    dimension_semantics=("parallel", "parallel", "arbitrary"),
                    vmem_limit_bytes=_vmem_limit(vmem_bytes, vmem_cap)),
                cost_estimate=cost,
            )(x_in, wt_p, b_p)

        return out if Fp == F else out[:, :F]

    return jax.jit(apply)


def masked_feedforward_block(x, weight, mask, bias, **kwargs):
    """One-shot convenience wrapper (prefer the factory for repeated calls)."""
    return make_masked_feedforward_block(weight, mask, bias, **kwargs)(x)


# ----------------------------- reference (pure JAX) ---------------------------
def masked_feedforward_block_ref(x, weight, mask, bias):
    return jax.nn.relu(x @ (weight * mask).T + bias)


# ----------------------------- demo -------------------------------------------
if __name__ == "__main__":
    # Module config: features = len(in_degrees) = 32, autoregressive_features = 32,
    # context_features=None, random_mask=False, dropout=0.0, no batch-norm.
    features = 32
    autoregressive_features = 32

    in_degrees = _get_input_degrees(autoregressive_features)        # 1..32
    mask_np, out_degrees = masked_linear_mask_and_degrees(
        in_degrees, features, autoregressive_features,
        random_mask=False, is_output=False)

    key = jax.random.PRNGKey(0)
    kx1, kx2, kw, kb = jax.random.split(key, 4)
    bound = 1.0 / np.sqrt(features)
    weight = jax.random.uniform(kw, (features, features), jnp.float32,
                                minval=-bound, maxval=bound)
    bias = jax.random.uniform(kb, (features,), jnp.float32,
                              minval=-bound, maxval=bound)
    mask = jnp.asarray(mask_np, dtype=jnp.float32)

    # Mask fold / transpose / pad happen ONCE here (module-init time).
    block = make_masked_feedforward_block(weight, mask, bias)

    # Small batch -> single grid step (whole batch in one MXU pass).
    x_small = jax.random.normal(kx1, (16, features), dtype=jnp.float32)
    out_small = jax.block_until_ready(block(x_small))
    np.testing.assert_allclose(
        np.asarray(out_small),
        np.asarray(masked_feedforward_block_ref(x_small, weight, mask, bias)),
        rtol=1e-5, atol=1e-5)

    # Larger batch that is not a multiple of the tile -> multi-step pipelined
    # grid with a ragged last block (no batch padding, no output batch slice).
    x_big = jax.random.normal(kx2, (300, features), dtype=jnp.float32)
    out_big = jax.block_until_ready(block(x_big))
    np.testing.assert_allclose(
        np.asarray(out_big),
        np.asarray(masked_feedforward_block_ref(x_big, weight, mask, bias)),
        rtol=1e-5, atol=1e-5)

    print("KERNEL_OK")
</pallas_src>

<mosaic_0001>
module attributes {stable_mosaic.version = 11 : i64} {
  func.func @kernel(%arg0: i32, %arg1: memref<16x128xf32, #tpu.memory_space<vmem>>, %arg2: memref<128x128xf32, #tpu.memory_space<vmem>>, %arg3: memref<1x128xf32, #tpu.memory_space<vmem>>, %arg4: memref<16x128xf32, #tpu.memory_space<vmem>>) attributes {dimension_semantics = [#tpu.dimension_semantics<parallel>], iteration_bounds = array<i64: 1>, scalar_prefetch = 0 : i64, scratch_operands = 0 : i64, tpu.core_type = #tpu.core_type<tc>, window_params = [{transform_indices = @transform_0, window_bounds = array<i64: 16, 128>}, {pipeline_mode = #tpu.pipeline_mode<synchronous>, transform_indices = @transform_1, window_bounds = array<i64: 128, 128>}, {pipeline_mode = #tpu.pipeline_mode<synchronous>, transform_indices = @transform_2, window_bounds = array<i64: 1, 128>}, {transform_indices = @transform_3, window_bounds = array<i64: 16, 128>}]} {
    %c0 = arith.constant 0 : index
    %c0_0 = arith.constant 0 : index
    %0 = vector.load %arg1[%c0, %c0_0] : memref<16x128xf32, #tpu.memory_space<vmem>>, vector<16x128xf32>
    %c0_1 = arith.constant 0 : index
    %c0_2 = arith.constant 0 : index
    %1 = vector.load %arg2[%c0_1, %c0_2] : memref<128x128xf32, #tpu.memory_space<vmem>>, vector<128x128xf32>
    %cst = arith.constant dense<0.000000e+00> : vector<16x128xf32>
    %2 = tpu.matmul %0, %1, %cst {dimension_numbers = #tpu.dot_dimension_numbers<[1], [0], [0], [1], [0, 0, 1, 1], [], []>} : vector<16x128xf32>, vector<128x128xf32>, vector<16x128xf32> -> vector<16x128xf32>
    %c0_3 = arith.constant 0 : index
    %c0_4 = arith.constant 0 : index
    %3 = vector.load %arg3[%c0_3, %c0_4] : memref<1x128xf32, #tpu.memory_space<vmem>>, vector<1x128xf32>
    %4 = vector.broadcast %3 : vector<1x128xf32> to vector<16x128xf32>
    %5 = arith.addf %2, %4 : vector<16x128xf32>
    %cst_5 = arith.constant 0.000000e+00 : f32
    %6 = vector.broadcast %cst_5 : f32 to vector<16x128xf32>
    %7 = arith.maximumf %5, %6 : vector<16x128xf32>
    %c0_6 = arith.constant 0 : index
    %c0_7 = arith.constant 0 : index
    %8 = vector.load %arg4[%c0_6, %c0_7] : memref<16x128xf32, #tpu.memory_space<vmem>>, vector<16x128xf32>
    tpu.vector_store %arg4[%c0_6, %c0_7], %7 {strides = array<i32>} : memref<16x128xf32, #tpu.memory_space<vmem>>, vector<16x128xf32>,
    return
  }
  func.func @transform_0(%arg0: i32) -> (i32, i32) {
    %c0_i32 = arith.constant 0 : i32
    %c0_i32_0 = arith.constant 0 : i32
    return %arg0, %c0_i32 : i32, i32
  }
  func.func @transform_1(%arg0: i32) -> (i32, i32) {
    %c0_i32 = arith.constant 0 : i32
    %c0_i32_0 = arith.constant 0 : i32
    %c0_i32_1 = arith.constant 0 : i32
    return %c0_i32, %c0_i32_0 : i32, i32
  }
  func.func @transform_2(%arg0: i32) -> (i32, i32) {
    %c0_i32 = arith.constant 0 : i32
    %c0_i32_0 = arith.constant 0 : i32
    %c0_i32_1 = arith.constant 0 : i32
    return %c0_i32, %c0_i32_0 : i32, i32
  }
  func.func @transform_3(%arg0: i32) -> (i32, i32) {
    %c0_i32 = arith.constant 0 : i32
    %c0_i32_0 = arith.constant 0 : i32
    return %arg0, %c0_i32 : i32, i32
  }
}

</mosaic_0001>

<llo_original>
// kernel: apply.1
$region0: #{apply.1}
  #allocation0 [shape = 'u32[]', space=smem, size = 0x4, offset = 0x4, fixed_abs, tag = 'smem constant byte address 0x4 - core index']
  #allocation1 [shape = 'u32[72,128]{1,0:T(1,128)}', space=vmem, size = 0x9000, scoped, tag = 'internal scratch']
  %s0 = inlined_call_operand.vmem [shape: f32[16,128], index: 0, kind: input, shape index: {}]
  %s1 = inlined_call_operand.hbm [shape: f32[128,128], index: 1, kind: input, shape index: {}]
  %s2 = inlined_call_operand.vmem [shape: f32[1,128], index: 2, kind: input, shape index: {}]
  %s3 = inlined_call_operand.hbm [shape: f32[16,128], index: 3, kind: output, shape index: {}]
  %s4 = sld [smem:[#allocation0]]
  $region26: #{apply.1} parent=0
    _
  %s6 = ssub.s32 1, %s4
  %s7 = scalar_select 0, %s6, %s4
  $region1: #{apply.1} parent=0
    #allocation2 [shape = 'u8[65536]{0}', space=vmem, size = 0x10000, scoped, tag = 'input window, operand 1, single buffered']
    #allocation3 [shape = 's32[1]{0}', space=sflag, size = 0x4, scoped, tag = 'scoped memory for apply.1']
    #allocation4 [shape = 's32[1]{0}', space=sflag, size = 0x4, scoped, tag = 'scoped memory for apply.1']
    #allocation5 [shape = 'u8[8192]{0}', space=vmem, size = 0x2000, scoped, tag = 'output window, operand 0, single buffered']
    %8 = vsyncpa [#allocation3], 0
    %9 = vsyncpa [#allocation4], 0
    // Predicated region
    $region2: #{apply.1} parent=1 // pred_check
      _
    $region3: #{apply.1} parent=1 // pred_check_branch
      %11 = sbr.rel (0) target = $region5
    $region4: #{apply.1} parent=1 // pred_region
      _
    $region5: #{apply.1} parent=1 // pred_fallthru
      _
    // Predicated region
    $region6: #{apply.1} parent=1 // pred_check
      _
    $region7: #{apply.1} parent=1 // pred_check_branch
      %13 = sbr.rel (0) target = $region9
    $region8: #{apply.1} parent=1 // pred_region
      %15 = vsyncadd [#allocation3], 0
      %s16 = sshll.u32 %s1, 4
      %s17 = int_to_ptr.hbm [resolvable:$true] %s16
      %s18 = sshll.u32 [#allocation2], 4
      %s19 = int_to_ptr.vmem [resolvable:$true] %s18
      %24 = dma.hbm_to_vmem [thread:$0]  %s17, 2048, %s19, [#allocation3], 128, 128, 8
    $region9: #{apply.1} parent=1 // pred_fallthru
      _
    // Predicated region
    $region10: #{apply.1} parent=1 // pred_check
      _
    $region11: #{apply.1} parent=1 // pred_check_branch
      %26 = sbr.rel (0) target = $region13
    $region12: #{apply.1} parent=1 // pred_region
      _
    $region13: #{apply.1} parent=1 // pred_fallthru
      _
    // Predicated region
    $region14: #{apply.1} parent=1 // pred_check
      _
    $region15: #{apply.1} parent=1 // pred_check_branch
      %28 = sbr.rel (0) target = $region17
    $region16: #{apply.1} parent=1 // pred_region
      %30 = dma.done [#allocation3], 2048
    $region17: #{apply.1} parent=1 // pred_fallthru
      _
    %v31 = vld [vmem:[%s0] sm:$0xff]
    %v32 = vld [vmem:[%s0 + $0x8] sm:$0xff]
    %v33 = vld [vmem:[#allocation2] sm:$0xff]
    %v34 = vld [vmem:[#allocation2 + $0x8] sm:$0xff]
    %v35 = vld [vmem:[#allocation2 + $0x10] sm:$0xff]
    %v36 = vld [vmem:[#allocation2 + $0x18] sm:$0xff]
    %v37 = vld [vmem:[#allocation2 + $0x20] sm:$0xff]
    %v38 = vld [vmem:[#allocation2 + $0x28] sm:$0xff]
    %v39 = vld [vmem:[#allocation2 + $0x30] sm:$0xff]
    %v40 = vld [vmem:[#allocation2 + $0x38] sm:$0xff]
    %v41 = vld [vmem:[#allocation2 + $0x40] sm:$0xff]
    %v42 = vld [vmem:[#allocation2 + $0x48] sm:$0xff]
    %v43 = vld [vmem:[#allocation2 + $0x50] sm:$0xff]
    %v44 = vld [vmem:[#allocation2 + $0x58] sm:$0xff]
    %v45 = vld [vmem:[#allocation2 + $0x60] sm:$0xff]
    %v46 = vld [vmem:[#allocation2 + $0x68] sm:$0xff]
    %v47 = vld [vmem:[#allocation2 + $0x70] sm:$0xff]
    %v48 = vld [vmem:[#allocation2 + $0x78] sm:$0xff]
    %v49 = vld [vmem:[%s2] sm:$0x1]
    %v51 = vperm.slane %v49, 0
    %53 = vmatpush.msra.mxu0 %v48
    %54 = vmatpush.msra.mxu0 %v47
    %55 = vmatpush.msra.mxu0 %v46
    %56 = vmatpush.msra.mxu0 %v45
    %57 = vmatpush.msra.mxu0 %v44
    %58 = vmatpush.msra.mxu0 %v43
    %59 = vmatpush.msra.mxu0 %v42
    %60 = vmatpush.msra.mxu0 %v41
    %61 = vmatpush.msra.mxu0 %v40
    %62 = vmatpush.msra.mxu0 %v39
    %63 = vmatpush.msra.mxu0 %v38
    %64 = vmatpush.msra.mxu0 %v37
    %65 = vmatpush.msra.mxu0 %v36
    %66 = vmatpush.msra.mxu0 %v35
    %67 = vmatpush.msra.mxu0 %v34
    %68 = vmatpush.msra.mxu0 %v33
    %69 = vmatmul.f32.gmra.mxu0 %v31
    %v70 = vpop.f32.mrf.mxu0
    %v71 = vadd.f32 %v51, %v70
    %72 = vmatmul.f32.gmra.mxu0 %v32
    %v73 = vpop.f32.mrf.mxu0
    %v74 = vadd.f32 %v51, %v73
    %75 = vdwg.mxu0
    %v76 = vmax.f32 %v71, 0.0
    %v77 = vmax.f32 %v74, 0.0
    %78 = vst [vmem:[#allocation5] sm:$0xff] %v76
    %79 = vst [vmem:[#allocation5 + $0x8] sm:$0xff] %v77
    // Predicated region
    $region18: #{apply.1} parent=1 // pred_check
      _
    $region19: #{apply.1} parent=1 // pred_check_branch
      %81 = sbr.rel (0) target = $region21
    $region20: #{apply.1} parent=1 // pred_region
      %83 = vsyncadd [#allocation4], 0
      %s84 = sshll.u32 [#allocation5], 4
      %s85 = int_to_ptr.vmem [resolvable:$true] %s84
      %s86 = sshll.u32 %s3, 4
      %s87 = int_to_ptr.hbm [resolvable:$true] %s86
      %92 = dma.vmem_to_hbm [thread:$0]  %s85, 256, %s87, [#allocation4], 128, 128, 8
    $region21: #{apply.1} parent=1 // pred_fallthru
      _
    // Predicated region
    $region22: #{apply.1} parent=1 // pred_check
      _
    $region23: #{apply.1} parent=1 // pred_check_branch
      %94 = sbr.rel (0) target = $region25
    $region24: #{apply.1} parent=1 // pred_region
      %96 = dma.done [#allocation4], 256
    $region25: #{apply.1} parent=1 // pred_fallthru
      _
    %97 = vsyncpa [#allocation3], 1
    %98 = vsyncpa [#allocation4], 1

</llo_original>
